<compile_context>
chip_gen: v7x
topology: tpu7x:2x2x1
jax: 0.10.0
libtpu: 0.0.40
codegen_flags: <defaults>
</compile_context>

<pallas_src>
import jax
import jax.numpy as jnp
from jax.experimental import pallas as pl
from jax.experimental.pallas import tpu as pltpu

HIDDEN = 384     # sentence-transformer embedding dim (all-MiniLM style)
LANE = 128
SUBLANE = 8
TILE_B = 256     # batch tile for the gridded (large-batch) path
GRID_THRESHOLD = 256   # batches larger than this use the batch-tiled path


def _round_up(x, m):
    return ((x + m - 1) // m) * m


def _fused_heads_kernel(x_ref, w_ref, b_ref, o_ref):
    """out = x @ w + b.
    x: [B(_tile), 384] f32, w: [384, 128] bf16, b: [1, 128] f32,
    out: [B(_tile), 128] f32.  Lane axis is dense (128) -> unmasked vst on the
    lane dimension; bias broadcast across sublanes is a free VPU add."""
    x = x_ref[...].astype(jnp.bfloat16)
    o_ref[...] = (
        jnp.dot(x, w_ref[...], preferred_element_type=jnp.float32)
        + b_ref[...]
    )


def _cost_estimate(batch, n_pad):
    flops = 2 * batch * HIDDEN * n_pad
    bytes_accessed = (
        batch * HIDDEN * 4          # features (f32 in)
        + HIDDEN * n_pad * 2        # bf16 weight slab
        + n_pad * 4                 # bias row
        + batch * n_pad * 4         # f32 logits out
    )
    return pl.CostEstimate(flops=flops, transcendentals=0,
                           bytes_accessed=bytes_accessed)


@jax.jit
def _run_fused_small(features, w_all, b_row):
    """Gridless single-block call: whole arrays live in VMEM. Legal for any
    batch size (full-array blocks), intended for small/medium batches."""
    B, _ = features.shape
    n_pad = w_all.shape[1]
    return pl.pallas_call(
        _fused_heads_kernel,
        out_shape=jax.ShapeDtypeStruct((B, n_pad), jnp.float32),
        in_specs=[
            pl.BlockSpec(memory_space=pltpu.MemorySpace.VMEM),
            pl.BlockSpec(memory_space=pltpu.MemorySpace.VMEM),
            pl.BlockSpec(memory_space=pltpu.MemorySpace.VMEM),
        ],
        out_specs=pl.BlockSpec(memory_space=pltpu.MemorySpace.VMEM),
        cost_estimate=_cost_estimate(B, n_pad),
    )(features, w_all, b_row)


@jax.jit
def _run_fused_tiled(features, w_all, b_row):
    """Batch-tiled call for large batches: block (TILE_B, 384), weight slab
    pinned to block (0,0) so it stays VMEM-resident; parallel batch axis so
    Mosaic can shard rows across v7x's two TensorCores, and per-block VMEM
    stays a few hundred KiB on every generation (v5e 16 MiB scoped default,
    v7x 64 MiB physical)."""
    B, _ = features.shape
    n_pad = w_all.shape[1]
    grid = (pl.cdiv(B, TILE_B),)
    return pl.pallas_call(
        _fused_heads_kernel,
        out_shape=jax.ShapeDtypeStruct((B, n_pad), jnp.float32),
        grid=grid,
        in_specs=[
            pl.BlockSpec((TILE_B, HIDDEN), lambda i: (i, 0)),
            pl.BlockSpec((HIDDEN, n_pad), lambda i: (0, 0)),
            pl.BlockSpec((1, n_pad), lambda i: (0, 0)),
        ],
        out_specs=pl.BlockSpec((TILE_B, n_pad), lambda i: (i, 0)),
        compiler_params=pltpu.CompilerParams(
            dimension_semantics=("parallel",)),
        cost_estimate=_cost_estimate(B, n_pad),
    )(features, w_all, b_row)


class SentenceTransformerWithHeadsPallas:
    """JAX/Pallas mirror of the PyTorch SentenceTransformerWithHeads."""

    def __init__(self, num_classes_a, num_classes_b, key):
        self.num_classes_a = num_classes_a
        self.num_classes_b = num_classes_b
        ka_w, ka_b, kb_w, kb_b = jax.random.split(key, 4)
        # Deterministic synthetic init (PyTorch nn.Linear-like uniform bound).
        bound = 1.0 / (HIDDEN ** 0.5)
        # Stored pre-transposed: [D, N] (PyTorch nn.Linear keeps [N, D]).
        self.w_a = jax.random.uniform(
            ka_w, (HIDDEN, num_classes_a), jnp.float32, -bound, bound)
        self.b_a = jax.random.uniform(
            ka_b, (num_classes_a,), jnp.float32, -bound, bound)
        self.w_b = jax.random.uniform(
            kb_w, (HIDDEN, num_classes_b), jnp.float32, -bound, bound)
        self.b_b = jax.random.uniform(
            kb_b, (num_classes_b,), jnp.float32, -bound, bound)

        # --- Fused + lane-padded parameter slab, built ONCE at init. ---
        # Keep N_pad at 128 (lane-dense minimum); the kernel is DMA/launch
        # bound, widening to 256 only doubles weight traffic.
        n_total = num_classes_a + num_classes_b
        self.n_pad = _round_up(max(n_total, 1), LANE)
        w_all = jnp.zeros((HIDDEN, self.n_pad), jnp.float32)
        w_all = w_all.at[:, :num_classes_a].set(self.w_a)
        w_all = w_all.at[:, num_classes_a:n_total].set(self.w_b)
        self.w_all = w_all.astype(jnp.bfloat16)            # [384, 128] bf16
        b_all = jnp.zeros((self.n_pad,), jnp.float32)
        b_all = b_all.at[:num_classes_a].set(self.b_a)
        b_all = b_all.at[num_classes_a:n_total].set(self.b_b)
        self.b_row = b_all[None, :]                         # [1, 128] f32

        # Memo of the last fused logit slab, keyed on the features object, so
        # requesting head 'A' then 'B' on the same embeddings runs ONE kernel.
        self._memo = None

    # TODO(synk): the pretrained sentence-transformer `st.encode(x)` on raw
    # text has no Pallas equivalent; `features` stands in for its output.
    def _fused_logits(self, features):
        if self._memo is not None and self._memo[0] is features:
            return self._memo[1]
        if features.shape[0] > GRID_THRESHOLD:
            out = _run_fused_tiled(features, self.w_all, self.b_row)
        else:
            out = _run_fused_small(features, self.w_all, self.b_row)
        self._memo = (features, out)
        return out

    def forward(self, features, head):
        if head not in ('A', 'B'):
            raise ValueError("Please specify 'A' or 'B' for head")
        out_full = self._fused_logits(features)
        B = features.shape[0]
        na, nb = self.num_classes_a, self.num_classes_b
        if head == 'A':
            return out_full[:B, :na]
        return out_full[:B, na:na + nb]

    def forward_both(self, features):
        """Both heads from one kernel invocation."""
        out_full = self._fused_logits(features)
        B = features.shape[0]
        na, nb = self.num_classes_a, self.num_classes_b
        return out_full[:B, :na], out_full[:B, na:na + nb]


if __name__ == "__main__":
    key = jax.random.PRNGKey(0)
    k_feat, k_model = jax.random.split(key)

    batch = 2
    num_classes_a = 4
    num_classes_b = 8

    # Deterministic stand-in for st.encode(x): [batch, 384] embeddings.
    features = jax.random.normal(k_feat, (batch, HIDDEN), jnp.float32)

    model = SentenceTransformerWithHeadsPallas(num_classes_a, num_classes_b, k_model)

    # One fused kernel call serves both heads (memoized on `features`).
    out_a = model.forward(features, 'A')
    out_b = model.forward(features, 'B')
    out_a2, out_b2 = model.forward_both(features)
    jax.block_until_ready((out_a, out_b, out_a2, out_b2))

    # Cross-check against plain JAX f32 reference (bf16 weights -> relax atol).
    ref_a = features @ model.w_a + model.b_a[None, :]
    ref_b = features @ model.w_b + model.b_b[None, :]
    assert out_a.shape == (batch, num_classes_a)
    assert out_b.shape == (batch, num_classes_b)
    assert jnp.allclose(out_a, ref_a, atol=2e-2)
    assert jnp.allclose(out_b, ref_b, atol=2e-2)
    assert jnp.allclose(out_a, out_a2) and jnp.allclose(out_b, out_b2)

    print("KERNEL_OK")
</pallas_src>

<mosaic_0001>
module attributes {stable_mosaic.version = 11 : i64} {
  func.func @_fused_heads_kernel(%arg0: memref<2x384xf32, #tpu.memory_space<vmem>>, %arg1: memref<384x128xbf16, #tpu.memory_space<vmem>>, %arg2: memref<1x128xf32, #tpu.memory_space<vmem>>, %arg3: memref<2x128xf32, #tpu.memory_space<vmem>>) attributes {dimension_semantics = [], scalar_prefetch = 0 : i64, scratch_operands = 0 : i64, tpu.core_type = #tpu.core_type<tc>} {
    %c0 = arith.constant 0 : index
    %c0_0 = arith.constant 0 : index
    %0 = vector.load %arg0[%c0, %c0_0] : memref<2x384xf32, #tpu.memory_space<vmem>>, vector<2x384xf32>
    %1 = arith.truncf %0 : vector<2x384xf32> to vector<2x384xbf16>
    %c0_1 = arith.constant 0 : index
    %c0_2 = arith.constant 0 : index
    %2 = vector.load %arg1[%c0_1, %c0_2] : memref<384x128xbf16, #tpu.memory_space<vmem>>, vector<384x128xbf16>
    %cst = arith.constant dense<0.000000e+00> : vector<2x128xf32>
    %3 = tpu.matmul %1, %2, %cst {dimension_numbers = #tpu.dot_dimension_numbers<[1], [0], [0], [1], [0, 0, 1, 1], [], []>} : vector<2x384xbf16>, vector<384x128xbf16>, vector<2x128xf32> -> vector<2x128xf32>
    %c0_3 = arith.constant 0 : index
    %c0_4 = arith.constant 0 : index
    %4 = vector.load %arg2[%c0_3, %c0_4] : memref<1x128xf32, #tpu.memory_space<vmem>>, vector<1x128xf32>
    %5 = vector.broadcast %4 : vector<1x128xf32> to vector<2x128xf32>
    %6 = arith.addf %3, %5 : vector<2x128xf32>
    %c0_5 = arith.constant 0 : index
    %c0_6 = arith.constant 0 : index
    %7 = vector.load %arg3[%c0_5, %c0_6] : memref<2x128xf32, #tpu.memory_space<vmem>>, vector<2x128xf32>
    tpu.vector_store %arg3[%c0_5, %c0_6], %6 {strides = array<i32>} : memref<2x128xf32, #tpu.memory_space<vmem>>, vector<2x128xf32>,
    return
  }
}

</mosaic_0001>

<llo_original>
// kernel: _run_fused_small.1
$region0: #{_run_fused_small.1}
  #allocation0 [shape = 'u32[]', space=smem, size = 0x4, offset = 0x4, fixed_abs, tag = 'smem constant byte address 0x4 - core index']
  #allocation1 [shape = 'u32[144,128]{1,0:T(1,128)}', space=vmem, size = 0x12000, scoped, tag = 'internal scratch']
  %s0 = inlined_call_operand.hbm [shape: f32[2,384], index: 0, kind: input, shape index: {}]
  %s1 = inlined_call_operand.hbm [shape: bf16[384,128], index: 1, kind: input, shape index: {}]
  %s2 = inlined_call_operand.vmem [shape: f32[1,128], index: 2, kind: input, shape index: {}]
  %s3 = inlined_call_operand.hbm [shape: f32[2,128], index: 3, kind: output, shape index: {}]
  %s4 = sld [smem:[#allocation0]]
  $region30: #{_run_fused_small.1} parent=0
    _
  %s6 = ssub.s32 1, %s4
  %s7 = scalar_select 0, %s6, %s4
  $region1: #{_run_fused_small.1} parent=0
    #allocation2 [shape = 'u8[3072]{0}', space=vmem, size = 0xc00, scoped, tag = 'input window, operand 0, single buffered']
    #allocation3 [shape = 's32[1]{0}', space=sflag, size = 0x4, scoped, tag = 'scoped memory for _run_fused_small.1']
    #allocation4 [shape = 's32[1]{0}', space=sflag, size = 0x4, scoped, tag = 'scoped memory for _run_fused_small.1']
    #allocation5 [shape = 'u8[98304]{0}', space=vmem, size = 0x18000, scoped, tag = 'input window, operand 1, single buffered']
    #allocation6 [shape = 's32[1]{0}', space=sflag, size = 0x4, scoped, tag = 'scoped memory for _run_fused_small.1']
    #allocation7 [shape = 'u8[1024]{0}', space=vmem, size = 0x400, scoped, tag = 'output window, operand 0, single buffered']
    %8 = vsyncpa [#allocation3], 0
    %9 = vsyncpa [#allocation6], 0
    %10 = vsyncpa [#allocation4], 0
    // Predicated region
    $region2: #{_run_fused_small.1} parent=1 // pred_check
      _
    $region3: #{_run_fused_small.1} parent=1 // pred_check_branch
      %12 = sbr.rel (0) target = $region5
    $region4: #{_run_fused_small.1} parent=1 // pred_region
      %s14 = ssub.s32 96, 96
      %15 = vsyncadd [#allocation3], %s14
      %s17 = sshll.u32 [#allocation2], 4
      %s18 = int_to_ptr.vmem [resolvable:$true] %s17
      %20 = dma.hbm_to_vmem [thread:$0]  %s0, 96, %s18, [#allocation3]
    $region5: #{_run_fused_small.1} parent=1 // pred_fallthru
      _
    // Predicated region
    $region6: #{_run_fused_small.1} parent=1 // pred_check
      _
    $region7: #{_run_fused_small.1} parent=1 // pred_check_branch
      %22 = sbr.rel (0) target = $region9
    $region8: #{_run_fused_small.1} parent=1 // pred_region
      %s24 = ssub.s32 3072, 3072
      %25 = vsyncadd [#allocation6], %s24
      %s26 = sshll.u32 [#allocation5], 4
      %s27 = int_to_ptr.vmem [resolvable:$true] %s26
      %32 = dma.hbm_to_vmem [thread:$0]  %s1, 3072, %s27, [#allocation6], 64, 64, 4
    $region9: #{_run_fused_small.1} parent=1 // pred_fallthru
      _
    // Predicated region
    $region10: #{_run_fused_small.1} parent=1 // pred_check
      _
    $region11: #{_run_fused_small.1} parent=1 // pred_check_branch
      %34 = sbr.rel (0) target = $region13
    $region12: #{_run_fused_small.1} parent=1 // pred_region
      _
    $region13: #{_run_fused_small.1} parent=1 // pred_fallthru
      _
    // Predicated region
    $region14: #{_run_fused_small.1} parent=1 // pred_check
      _
    $region15: #{_run_fused_small.1} parent=1 // pred_check_branch
      %36 = sbr.rel (0) target = $region17
    $region16: #{_run_fused_small.1} parent=1 // pred_region
      %37 = dma.done [#allocation3], 96
    $region17: #{_run_fused_small.1} parent=1 // pred_fallthru
      _
    // Predicated region
    $region18: #{_run_fused_small.1} parent=1 // pred_check
      _
    $region19: #{_run_fused_small.1} parent=1 // pred_check_branch
      %39 = sbr.rel (0) target = $region21
    $region20: #{_run_fused_small.1} parent=1 // pred_region
      %40 = dma.done [#allocation6], 3072
    $region21: #{_run_fused_small.1} parent=1 // pred_fallthru
      _
    %v42 = vld [vmem:[#allocation2] sm:$0x3f]
    %v44 = vcombine.high %v42, %v42
    %v46 = vunpack.c.l.s4 1983009808
    %v47 = vunpack.c.0.s8 %v46
    %v48 = vlaneseq
    %v49 = vshrl.u32 %v48, 7
    %v50 = vsub.s32 %v47, %v49
    %v51 = vrot.slane %v42, %v50
    %v53 = vunpack.c.l.s4 1983009808
    %v54 = vunpack.c.0.s8 %v53
    %v55 = vlaneseq
    %v56 = vshrl.u32 %v55, 7
    %v57 = vsub.s32 %v54, %v56
    %v58 = vrot.slane %v44, %v57
    %v59 = vcombine.high %v51, %v51
    %v63 = vpack.c.bf16 %v51, %v51
    %v64 = vpack.c.bf16 %v59, %v59
    %v65 = vpack.c.bf16 %v58, %v58
    %v66 = vld [vmem:[#allocation5] sm:$0xf]
    %v67 = vld [vmem:[#allocation5 + $0x4] sm:$0xf]
    %v68 = vld [vmem:[#allocation5 + $0x8] sm:$0xf]
    %v69 = vld [vmem:[#allocation5 + $0xc] sm:$0xf]
    %v70 = vld [vmem:[#allocation5 + $0x10] sm:$0xf]
    %v71 = vld [vmem:[#allocation5 + $0x14] sm:$0xf]
    %v72 = vld [vmem:[#allocation5 + $0x18] sm:$0xf]
    %v73 = vld [vmem:[#allocation5 + $0x1c] sm:$0xf]
    %v74 = vld [vmem:[#allocation5 + $0x20] sm:$0xf]
    %v75 = vld [vmem:[#allocation5 + $0x24] sm:$0xf]
    %v76 = vld [vmem:[#allocation5 + $0x28] sm:$0xf]
    %v77 = vld [vmem:[#allocation5 + $0x2c] sm:$0xf]
    %v78 = vld [vmem:[#allocation5 + $0x30] sm:$0xf]
    %v79 = vld [vmem:[#allocation5 + $0x34] sm:$0xf]
    %v80 = vld [vmem:[#allocation5 + $0x38] sm:$0xf]
    %v81 = vld [vmem:[#allocation5 + $0x3c] sm:$0xf]
    %v82 = vld [vmem:[#allocation5 + $0x40] sm:$0xf]
    %v83 = vld [vmem:[#allocation5 + $0x44] sm:$0xf]
    %v84 = vld [vmem:[#allocation5 + $0x48] sm:$0xf]
    %v85 = vld [vmem:[#allocation5 + $0x4c] sm:$0xf]
    %v86 = vld [vmem:[#allocation5 + $0x50] sm:$0xf]
    %v87 = vld [vmem:[#allocation5 + $0x54] sm:$0xf]
    %v88 = vld [vmem:[#allocation5 + $0x58] sm:$0xf]
    %v89 = vld [vmem:[#allocation5 + $0x5c] sm:$0xf]
    %v90 = vld [vmem:[#allocation5 + $0x60] sm:$0xf]
    %v91 = vld [vmem:[#allocation5 + $0x64] sm:$0xf]
    %v92 = vld [vmem:[#allocation5 + $0x68] sm:$0xf]
    %v93 = vld [vmem:[#allocation5 + $0x6c] sm:$0xf]
    %v94 = vld [vmem:[#allocation5 + $0x70] sm:$0xf]
    %v95 = vld [vmem:[#allocation5 + $0x74] sm:$0xf]
    %v96 = vld [vmem:[#allocation5 + $0x78] sm:$0xf]
    %v97 = vld [vmem:[#allocation5 + $0x7c] sm:$0xf]
    %v98 = vld [vmem:[#allocation5 + $0x80] sm:$0xf]
    %v99 = vld [vmem:[#allocation5 + $0x84] sm:$0xf]
    %v100 = vld [vmem:[#allocation5 + $0x88] sm:$0xf]
    %v101 = vld [vmem:[#allocation5 + $0x8c] sm:$0xf]
    %v102 = vld [vmem:[#allocation5 + $0x90] sm:$0xf]
    %v103 = vld [vmem:[#allocation5 + $0x94] sm:$0xf]
    %v104 = vld [vmem:[#allocation5 + $0x98] sm:$0xf]
    %v105 = vld [vmem:[#allocation5 + $0x9c] sm:$0xf]
    %v106 = vld [vmem:[#allocation5 + $0xa0] sm:$0xf]
    %v107 = vld [vmem:[#allocation5 + $0xa4] sm:$0xf]
    %v108 = vld [vmem:[#allocation5 + $0xa8] sm:$0xf]
    %v109 = vld [vmem:[#allocation5 + $0xac] sm:$0xf]
    %v110 = vld [vmem:[#allocation5 + $0xb0] sm:$0xf]
    %v111 = vld [vmem:[#allocation5 + $0xb4] sm:$0xf]
    %v112 = vld [vmem:[#allocation5 + $0xb8] sm:$0xf]
    %v113 = vld [vmem:[#allocation5 + $0xbc] sm:$0xf]
    %v114 = vld [vmem:[%s2] sm:$0x1]
    %v116 = vlaneseq
    %v117 = vshrl.u32 %v116, 7
    %v118 = vsub.s32 0, %v117
    %v119 = vrot.slane %v114, %v118
    %v169 = vunpack.c.l.b16 %v66
    %v170 = vunpack.c.l.b16 %v67
    %v171 = vunpack.c.l.b16 %v68
    %v172 = vunpack.c.l.b16 %v69
    %v173 = vunpack.c.l.b16 %v70
    %v174 = vunpack.c.l.b16 %v71
    %v175 = vunpack.c.l.b16 %v72
    %v176 = vunpack.c.l.b16 %v73
    %v177 = vunpack.c.l.b16 %v74
    %v178 = vunpack.c.l.b16 %v75
    %v179 = vunpack.c.l.b16 %v76
    %v180 = vunpack.c.l.b16 %v77
    %v181 = vunpack.c.l.b16 %v78
    %v182 = vunpack.c.l.b16 %v79
    %v183 = vunpack.c.l.b16 %v80
    %v184 = vunpack.c.l.b16 %v81
    %v185 = vunpack.c.l.b16 %v82
    %v186 = vunpack.c.l.b16 %v83
    %v187 = vunpack.c.l.b16 %v84
    %v188 = vunpack.c.l.b16 %v85
    %v189 = vunpack.c.l.b16 %v86
    %v190 = vunpack.c.l.b16 %v87
    %v191 = vunpack.c.l.b16 %v88
    %v192 = vunpack.c.l.b16 %v89
    %v193 = vunpack.c.l.b16 %v90
    %v194 = vunpack.c.l.b16 %v91
    %v195 = vunpack.c.l.b16 %v92
    %v196 = vunpack.c.l.b16 %v93
    %v197 = vunpack.c.l.b16 %v94
    %v198 = vunpack.c.l.b16 %v95
    %v199 = vunpack.c.l.b16 %v96
    %v200 = vunpack.c.l.b16 %v97
    %v201 = vunpack.c.l.b16 %v98
    %v202 = vunpack.c.l.b16 %v99
    %v203 = vunpack.c.l.b16 %v100
    %v204 = vunpack.c.l.b16 %v101
    %v205 = vunpack.c.l.b16 %v102
    %v206 = vunpack.c.l.b16 %v103
    %v207 = vunpack.c.l.b16 %v104
    %v208 = vunpack.c.l.b16 %v105
    %v209 = vunpack.c.l.b16 %v106
    %v210 = vunpack.c.l.b16 %v107
    %v211 = vunpack.c.l.b16 %v108
    %v212 = vunpack.c.l.b16 %v109
    %v213 = vunpack.c.l.b16 %v110
    %v214 = vunpack.c.l.b16 %v111
    %v215 = vunpack.c.l.b16 %v112
    %v216 = vunpack.c.l.b16 %v113
    %v217 = vpack.c.b16 %v170, %v169
    %v218 = vpack.c.b16 %v172, %v171
    %v219 = vpack.c.b16 %v174, %v173
    %v220 = vpack.c.b16 %v176, %v175
    %v221 = vpack.c.b16 %v178, %v177
    %v222 = vpack.c.b16 %v180, %v179
    %v223 = vpack.c.b16 %v182, %v181
    %v224 = vpack.c.b16 %v184, %v183
    %v225 = vpack.c.b16 %v186, %v185
    %v226 = vpack.c.b16 %v188, %v187
    %v227 = vpack.c.b16 %v190, %v189
    %v228 = vpack.c.b16 %v192, %v191
    %v229 = vpack.c.b16 %v194, %v193
    %v230 = vpack.c.b16 %v196, %v195
    %v231 = vpack.c.b16 %v198, %v197
    %v232 = vpack.c.b16 %v200, %v199
    %v233 = vpack.c.b16 %v202, %v201
    %v234 = vpack.c.b16 %v204, %v203
    %v235 = vpack.c.b16 %v206, %v205
    %v236 = vpack.c.b16 %v208, %v207
    %v237 = vpack.c.b16 %v210, %v209
    %v238 = vpack.c.b16 %v212, %v211
    %v239 = vpack.c.b16 %v214, %v213
    %v240 = vpack.c.b16 %v216, %v215
    %265 = vmatprep.subr.bf16.mxu0 0
    %266 = vmatpush1.bf16.msra.mxu0 %v217
    %267 = vmatprep.subr.bf16.mxu0 0
    %268 = vmatpush1.bf16.msra.mxu0 %v218
    %269 = vmatprep.subr.bf16.mxu0 0
    %270 = vmatpush1.bf16.msra.mxu0 %v219
    %271 = vmatprep.subr.bf16.mxu0 0
    %272 = vmatpush1.bf16.msra.mxu0 %v220
    %273 = vmatprep.subr.bf16.mxu0 0
    %274 = vmatpush1.bf16.msra.mxu0 %v221
    %275 = vmatprep.subr.bf16.mxu0 0
    %276 = vmatpush1.bf16.msra.mxu0 %v222
    %277 = vmatprep.subr.bf16.mxu0 0
    %278 = vmatpush1.bf16.msra.mxu0 %v223
    %279 = vmatprep.subr.bf16.mxu0 0
    %280 = vmatpush1.bf16.msra.mxu0 %v224
    %281 = vmatprep.subr.bf16.mxu0 0
    %282 = vmatpush1.bf16.msra.mxu0 %v225
    %283 = vmatprep.subr.bf16.mxu0 0
    %284 = vmatpush1.bf16.msra.mxu0 %v226
    %285 = vmatprep.subr.bf16.mxu0 0
    %286 = vmatpush1.bf16.msra.mxu0 %v227
    %287 = vmatprep.subr.bf16.mxu0 0
    %288 = vmatpush1.bf16.msra.mxu0 %v228
    %289 = vmatprep.subr.bf16.mxu0 0
    %290 = vmatpush1.bf16.msra.mxu0 %v229
    %291 = vmatprep.subr.bf16.mxu0 0
    %292 = vmatpush1.bf16.msra.mxu0 %v230
    %293 = vmatprep.subr.bf16.mxu0 0
    %294 = vmatpush1.bf16.msra.mxu0 %v231
    %295 = vmatprep.subr.bf16.mxu0 0
    %296 = vmatpush1.bf16.msra.mxu0 %v232
    %297 = vmatprep.mubr.bf16.mxu0 %v64
    %298 = vmatmul.mubr.bf16.gmra.mrb[0].mxu0 %v63
    %v299 = vpop.f32.mrb[0].mxu0
    %v300 = vadd.f32 %v119, %v299
    %v301 = vpop.f32.mrb[0].mxu0
    %v302 = vpop.f32.mrb[0].mxu0
    %v303 = vpop.f32.mrb[0].mxu0
    %304 = vdwg.mxu0
    %305 = vmatprep.subr.bf16.mxu0 0
    %306 = vmatpush1.bf16.msra.mxu0 %v233
    %307 = vmatprep.subr.bf16.mxu0 0
    %308 = vmatpush1.bf16.msra.mxu0 %v234
    %309 = vmatprep.subr.bf16.mxu0 0
    %310 = vmatpush1.bf16.msra.mxu0 %v235
    %311 = vmatprep.subr.bf16.mxu0 0
    %312 = vmatpush1.bf16.msra.mxu0 %v236
    %313 = vmatprep.subr.bf16.mxu0 0
    %314 = vmatpush1.bf16.msra.mxu0 %v237
    %315 = vmatprep.subr.bf16.mxu0 0
    %316 = vmatpush1.bf16.msra.mxu0 %v238
    %317 = vmatprep.subr.bf16.mxu0 0
    %318 = vmatpush1.bf16.msra.mxu0 %v239
    %319 = vmatprep.subr.bf16.mxu0 0
    %320 = vmatpush1.bf16.msra.mxu0 %v240
    %321 = vmatprep.subr.bf16.mxu0 0
    %322 = vmatpush1.bf16.msra.mxu0 0
    %323 = vmatprep.subr.bf16.mxu0 0
    %324 = vmatpush1.bf16.msra.mxu0 0
    %325 = vmatprep.subr.bf16.mxu0 0
    %326 = vmatpush1.bf16.msra.mxu0 0
    %327 = vmatprep.subr.bf16.mxu0 0
    %328 = vmatpush1.bf16.msra.mxu0 0
    %329 = vmatprep.subr.bf16.mxu0 0
    %330 = vmatpush1.bf16.msra.mxu0 0
    %331 = vmatprep.subr.bf16.mxu0 0
    %332 = vmatpush1.bf16.msra.mxu0 0
    %333 = vmatprep.subr.bf16.mxu0 0
    %334 = vmatpush1.bf16.msra.mxu0 0
    %335 = vmatprep.subr.bf16.mxu0 0
    %336 = vmatpush1.bf16.msra.mxu0 0
    %337 = vmatprep.mubr.bf16.mxu0 0
    %338 = vmatmul.mubr.bf16.gmra.mrb[0].mxu0 %v65
    %v339 = vpop.f32.mrb[0].mxu0
    %v340 = vadd.f32 %v300, %v339
    %v341 = vpop.f32.mrb[0].mxu0
    %v342 = vpop.f32.mrb[0].mxu0
    %v343 = vpop.f32.mrb[0].mxu0
    %344 = vdwg.mxu0
    %345 = vst [vmem:[#allocation7] sm:$0x3] %v340
    // Predicated region
    $region22: #{_run_fused_small.1} parent=1 // pred_check
      _
    $region23: #{_run_fused_small.1} parent=1 // pred_check_branch
      %347 = sbr.rel (0) target = $region25
    $region24: #{_run_fused_small.1} parent=1 // pred_region
      %s349 = ssub.s32 32, 32
      %350 = vsyncadd [#allocation4], %s349
      %s352 = sshll.u32 [#allocation7], 4
      %s353 = int_to_ptr.vmem [resolvable:$true] %s352
      %355 = dma.vmem_to_hbm [thread:$0]  %s353, 32, %s3, [#allocation4]
    $region25: #{_run_fused_small.1} parent=1 // pred_fallthru
      _
    // Predicated region
    $region26: #{_run_fused_small.1} parent=1 // pred_check
      _
    $region27: #{_run_fused_small.1} parent=1 // pred_check_branch
      %357 = sbr.rel (0) target = $region29
    $region28: #{_run_fused_small.1} parent=1 // pred_region
      %358 = dma.done [#allocation4], 32
    $region29: #{_run_fused_small.1} parent=1 // pred_fallthru
      _
    %359 = vsyncpa [#allocation3], 1
    %360 = vsyncpa [#allocation6], 1
    %361 = vsyncpa [#allocation4], 1

</llo_original>
